<compile_context>
chip_gen: v7x
topology: tpu7x:2x2x1
jax: 0.10.0
libtpu: 0.0.40
codegen_flags: <defaults>
</compile_context>

<pallas_src>
import functools

import jax
import jax.numpy as jnp
from jax.experimental import pallas as pl
from jax.experimental.pallas import tpu as pltpu

LEAKY = 0.5
THRESHOLD = 1.0
LANE = 128


# ----------------------------------------------------------------------------
# Kernels
# ----------------------------------------------------------------------------
def gpn_eval_kernel(x_ref, v_ref, spike_ref, vout_ref):
    """Single-timestep GPN update, eval mode (v_reset == 0)."""
    # (1 - leaky) * v + leaky * x  with  leaky == 0.5
    v_hidden = LEAKY * (v_ref[...] + x_ref[...])
    fired = v_hidden >= THRESHOLD  # ATan surrogate forward == Heaviside step
    spike_ref[...] = fired.astype(spike_ref.dtype)
    vout_ref[...] = jnp.where(fired, jnp.zeros_like(v_hidden), v_hidden)


def gpn_seq_kernel(x_ref, vinit_ref, spike_ref, vout_ref, v_scr):
    """Fused multi-timestep GPN: v stays resident in VMEM across the T grid axis."""
    t = pl.program_id(1)

    @pl.when(t == 0)
    def _():
        v_scr[...] = vinit_ref[...]

    v_hidden = LEAKY * (v_scr[...] + x_ref[0])
    fired = v_hidden >= THRESHOLD
    spike_ref[0] = fired.astype(spike_ref.dtype)
    v_scr[...] = jnp.where(fired, jnp.zeros_like(v_hidden), v_hidden)

    @pl.when(t == pl.num_programs(1) - 1)
    def _():
        vout_ref[...] = v_scr[...]


# ----------------------------------------------------------------------------
# Wrappers
# ----------------------------------------------------------------------------
def _round_up(x, m):
    return ((x + m - 1) // m) * m


def _choose_block_rows(rows, block_rows):
    # Prefer >= 2 grid steps when the input is big enough (lets the runtime shard
    # blocks across v7x's two TensorCores); never below one (8, 128) f32 tile.
    if rows > 8:
        block_rows = min(block_rows, _round_up(pl.cdiv(rows, 2), 8))
    return max(8, min(block_rows, _round_up(rows, 8)))


def _flatten_lanes(a):
    """Flatten to lane-dense (rows, 128). Pads only when numel % 128 != 0."""
    n = a.size
    rows = pl.cdiv(n, LANE)
    pad = rows * LANE - n
    flat = a.reshape(n)
    if pad:
        flat = jnp.pad(flat, (0, pad))
    return flat.reshape(rows, LANE), n, pad


@functools.partial(jax.jit, static_argnames=("block_rows", "spike_dtype"))
def gpn_forward(x, v, *, block_rows=2048, spike_dtype=None):
    """One GPN eval-mode step. Returns (spike, v_new); assumes v_reset == 0."""
    orig_shape = x.shape
    out_dtype = x.dtype
    spike_dtype = out_dtype if spike_dtype is None else spike_dtype

    x2, n, pad = _flatten_lanes(x)
    v2, _, _ = _flatten_lanes(v)
    rows = x2.shape[0]

    br = _choose_block_rows(rows, block_rows)
    grid = (pl.cdiv(rows, br),)
    spec = pl.BlockSpec((br, LANE), lambda i: (i, 0))

    spike2, vnew2 = pl.pallas_call(
        gpn_eval_kernel,
        grid_spec=pltpu.PrefetchScalarGridSpec(
            num_scalar_prefetch=0,
            grid=grid,
            in_specs=[spec, spec],
            out_specs=[spec, spec],
        ),
        out_shape=(
            jax.ShapeDtypeStruct((rows, LANE), spike_dtype),
            jax.ShapeDtypeStruct((rows, LANE), out_dtype),
        ),
        # Donate the old membrane-potential buffer to v_new (avoids a fresh HBM
        # allocation every SNN timestep).
        input_output_aliases={1: 1},
        compiler_params=pltpu.CompilerParams(
            dimension_semantics=("parallel",)),
    )(x2, v2)

    if pad:
        spike = spike2.reshape(rows * LANE)[:n].reshape(orig_shape)
        v_new = vnew2.reshape(rows * LANE)[:n].reshape(orig_shape)
    else:
        spike = spike2.reshape(orig_shape)
        v_new = vnew2.reshape(orig_shape)
    return spike, v_new


@functools.partial(jax.jit, static_argnames=("block_rows",))
def gpn_forward_seq(xs, v0=None, *, block_rows=2048):
    """Fused T-timestep GPN (eval mode). xs: (T, ...). Returns (spikes, v_final).

    v is kept in a VMEM scratch across the (arbitrary) T grid axis, so per step
    only x[t] is read from HBM and spike[t] written back (no v round-trips).
    """
    T = xs.shape[0]
    step_shape = xs.shape[1:]
    dtype = xs.dtype

    n = 1
    for d in step_shape:
        n *= int(d)
    rows = pl.cdiv(n, LANE)
    pad = rows * LANE - n

    xs2 = xs.reshape(T, n)
    v02 = (jnp.zeros((n,), dtype) if v0 is None else v0.reshape(n))
    if pad:
        xs2 = jnp.pad(xs2, ((0, 0), (0, pad)))
        v02 = jnp.pad(v02, (0, pad))
    xs2 = xs2.reshape(T, rows, LANE)
    v02 = v02.reshape(rows, LANE)

    br = _choose_block_rows(rows, block_rows)
    grid = (pl.cdiv(rows, br), T)

    spikes2, vfin2 = pl.pallas_call(
        gpn_seq_kernel,
        grid_spec=pltpu.PrefetchScalarGridSpec(
            num_scalar_prefetch=0,
            grid=grid,
            in_specs=[
                pl.BlockSpec((1, br, LANE), lambda i, t: (t, i, 0)),
                pl.BlockSpec((br, LANE), lambda i, t: (i, 0)),
            ],
            out_specs=[
                pl.BlockSpec((1, br, LANE), lambda i, t: (t, i, 0)),
                pl.BlockSpec((br, LANE), lambda i, t: (i, 0)),
            ],
            scratch_shapes=[pltpu.VMEM((br, LANE), dtype)],
        ),
        out_shape=(
            jax.ShapeDtypeStruct((T, rows, LANE), dtype),
            jax.ShapeDtypeStruct((rows, LANE), dtype),
        ),
        compiler_params=pltpu.CompilerParams(
            dimension_semantics=("parallel", "arbitrary")),
    )(xs2, v02)

    if pad:
        spikes = spikes2.reshape(T, rows * LANE)[:, :n].reshape((T,) + step_shape)
        v_fin = vfin2.reshape(rows * LANE)[:n].reshape(step_shape)
    else:
        spikes = spikes2.reshape((T,) + step_shape)
        v_fin = vfin2.reshape(step_shape)
    return spikes, v_fin


class GPNState:
    """Minimal stateful wrapper mirroring the PyTorch MemoryModule behavior (eval mode)."""

    def __init__(self):
        self.v = None
        self.spike = None

    def reset(self):
        self.v = None
        self.spike = None

    def __call__(self, x):
        if self.spike is None:
            # eval mode: v_reset = zeros, v = v_reset, spike = zeros
            # TODO(synk): training mode draws v_reset ~ N(0, 0.05); that path needs a
            # 3-input kernel variant (extra v_reset stream) and is not implemented here.
            self.v = jnp.zeros_like(x)
            self.spike = jnp.zeros_like(x)
        spike, v_new = gpn_forward(x, self.v)
        self.spike = spike
        self.v = v_new
        return spike


# ----------------------------------------------------------------------------
# Pure-JAX reference (eval mode)
# ----------------------------------------------------------------------------
def reference_forward(x, v):
    v_hidden = LEAKY * (v + x)
    fired = v_hidden >= THRESHOLD
    spike = fired.astype(x.dtype)
    v_new = jnp.where(fired, jnp.zeros_like(v_hidden), v_hidden)
    return spike, v_new


if __name__ == "__main__":
    key = jax.random.PRNGKey(0)
    N, C, H, W = 2, 4, 16, 16  # NCHW, input_channels=4 (small synthetic config)
    T = 8
    keys = jax.random.split(key, T)
    # scale x so a reasonable fraction of neurons cross the threshold
    xs = jnp.stack(
        [3.0 * jax.random.normal(k, (N, C, H, W), dtype=jnp.float32) for k in keys])

    # --- single-step stateful module (matches the PyTorch eval-mode call pattern) ---
    neuron = GPNState()
    spikes_step = []
    for t in range(T):
        spikes_step.append(neuron(xs[t]))
    jax.block_until_ready(spikes_step)

    # pure-JAX reference replay
    v_ref = jnp.zeros((N, C, H, W), jnp.float32)
    ref_spikes = []
    for t in range(T):
        s, v_ref = reference_forward(xs[t], v_ref)
        ref_spikes.append(s)

    for t in range(T):
        assert jnp.array_equal(spikes_step[t], ref_spikes[t]), f"step-{t} spike mismatch"
    assert jnp.allclose(neuron.v, v_ref, atol=1e-6), "membrane potential mismatch"

    # --- fused multi-timestep kernel (v resident in VMEM across T) ---
    spikes_seq, v_fin = gpn_forward_seq(xs)
    jax.block_until_ready(spikes_seq)
    assert jnp.array_equal(spikes_seq, jnp.stack(ref_spikes)), "fused-seq spike mismatch"
    assert jnp.allclose(v_fin, v_ref, atol=1e-6), "fused-seq membrane potential mismatch"

    print("KERNEL_OK")
</pallas_src>

<mosaic_0001>
module attributes {stable_mosaic.version = 11 : i64} {
  func.func @gpn_eval_kernel(%arg0: i32, %arg1: memref<8x128xf32, #tpu.memory_space<vmem>>, %arg2: memref<8x128xf32, #tpu.memory_space<vmem>>, %arg3: memref<8x128xf32, #tpu.memory_space<vmem>>, %arg4: memref<8x128xf32, #tpu.memory_space<vmem>>) attributes {dimension_semantics = [#tpu.dimension_semantics<parallel>], iteration_bounds = array<i64: 2>, scalar_prefetch = 0 : i64, scratch_operands = 0 : i64, tpu.core_type = #tpu.core_type<tc>, window_params = [{transform_indices = @transform_0, window_bounds = array<i64: 8, 128>}, {transform_indices = @transform_1, window_bounds = array<i64: 8, 128>}, {transform_indices = @transform_2, window_bounds = array<i64: 8, 128>}, {transform_indices = @transform_3, window_bounds = array<i64: 8, 128>}]} {
    %c0 = arith.constant 0 : index
    %c0_0 = arith.constant 0 : index
    %0 = vector.load %arg2[%c0, %c0_0] : memref<8x128xf32, #tpu.memory_space<vmem>>, vector<8x128xf32>
    %c0_1 = arith.constant 0 : index
    %c0_2 = arith.constant 0 : index
    %1 = vector.load %arg1[%c0_1, %c0_2] : memref<8x128xf32, #tpu.memory_space<vmem>>, vector<8x128xf32>
    %2 = arith.addf %0, %1 : vector<8x128xf32>
    %cst = arith.constant 5.000000e-01 : f32
    %3 = vector.broadcast %cst : f32 to vector<8x128xf32>
    %4 = arith.mulf %3, %2 : vector<8x128xf32>
    %cst_3 = arith.constant 1.000000e+00 : f32
    %5 = vector.broadcast %cst_3 : f32 to vector<8x128xf32>
    %6 = arith.cmpf oge, %4, %5 : vector<8x128xf32>
    %7 = arith.extui %6 : vector<8x128xi1> to vector<8x128xi32>
    %8 = arith.sitofp %7 : vector<8x128xi32> to vector<8x128xf32>
    %c0_4 = arith.constant 0 : index
    %c0_5 = arith.constant 0 : index
    %9 = vector.load %arg3[%c0_4, %c0_5] : memref<8x128xf32, #tpu.memory_space<vmem>>, vector<8x128xf32>
    tpu.vector_store %arg3[%c0_4, %c0_5], %8 {strides = array<i32>} : memref<8x128xf32, #tpu.memory_space<vmem>>, vector<8x128xf32>,
    %cst_6 = arith.constant 0.000000e+00 : f32
    %10 = vector.broadcast %cst_6 : f32 to vector<8x128xf32>
    %11 = arith.select %6, %10, %4 : vector<8x128xi1>, vector<8x128xf32>
    %c0_7 = arith.constant 0 : index
    %c0_8 = arith.constant 0 : index
    %12 = vector.load %arg4[%c0_7, %c0_8] : memref<8x128xf32, #tpu.memory_space<vmem>>, vector<8x128xf32>
    tpu.vector_store %arg4[%c0_7, %c0_8], %11 {strides = array<i32>} : memref<8x128xf32, #tpu.memory_space<vmem>>, vector<8x128xf32>,
    return
  }
  func.func @transform_0(%arg0: i32) -> (i32, i32) {
    %c0_i32 = arith.constant 0 : i32
    %c0_i32_0 = arith.constant 0 : i32
    return %arg0, %c0_i32 : i32, i32
  }
  func.func @transform_1(%arg0: i32) -> (i32, i32) {
    %c0_i32 = arith.constant 0 : i32
    %c0_i32_0 = arith.constant 0 : i32
    return %arg0, %c0_i32 : i32, i32
  }
  func.func @transform_2(%arg0: i32) -> (i32, i32) {
    %c0_i32 = arith.constant 0 : i32
    %c0_i32_0 = arith.constant 0 : i32
    return %arg0, %c0_i32 : i32, i32
  }
  func.func @transform_3(%arg0: i32) -> (i32, i32) {
    %c0_i32 = arith.constant 0 : i32
    %c0_i32_0 = arith.constant 0 : i32
    return %arg0, %c0_i32 : i32, i32
  }
}

</mosaic_0001>

<llo_original>
// kernel: gpn_forward.1
$region0: #{gpn_forward.1}
  #allocation0 [shape = 'u32[]', space=smem, size = 0x4, offset = 0x4, fixed_abs, tag = 'smem constant byte address 0x4 - core index']
  #allocation1 [shape = 'u32[144,128]{1,0:T(1,128)}', space=vmem, size = 0x12000, scoped, tag = 'internal scratch']
  %s0 = inlined_call_operand.vmem [shape: f32[16,128], index: 0, kind: input, shape index: {}]
  %s1 = inlined_call_operand.vmem [shape: f32[16,128], index: 1, kind: input, shape index: {}, may-alias: {1,3}]
  %s2 = inlined_call_operand.vmem [shape: f32[16,128], index: 2, kind: output, shape index: {0}]
  %s3 = inlined_call_operand.vmem [shape: f32[16,128], index: 3, kind: output, shape index: {1}, may-alias: {1,3}]
  %4 = xla_tuple %s2, %s3
  %s5 = sld [smem:[#allocation0]]
  $region49: #{gpn_forward.1} parent=0
    _
  %s7 = ssub.s32 1, %s5
  %s8 = scalar_select 0, %s7, %s5
  loop: start=0, step=1, limit=4
  $region2: #{gpn_forward.1} parent=0 // loop_pre_header
    _
  $region3: #{gpn_forward.1} parent=0 // loop_header
    %s10 = sphi 0, %s14
    %p11 = scmp.ge.s32.totalorder %s10, 4
    %s20 = sphi 0, %s22
    %s23 = sphi 0, %s20
    %s24 = sphi 0, %s23
    %s40 = sphi 0, %s24
    %s46 = sphi 0, %s48
    %s49 = sphi 0, %s46
    %s50 = sphi 0, %s49
    %s66 = sphi 0, %s50
    %s72 = sphi 0, %s74
    %s75 = sphi 0, %s72
    %s76 = sphi 0, %s75
    %s92 = sphi 0, %s76
    %s98 = sphi 0, %s100
    %s101 = sphi 0, %s98
    %s102 = sphi 0, %s101
    %s118 = sphi 0, %s102
  $region4: #{gpn_forward.1} parent=0 // loop_header_branch
    %13 = sbr.rel (%p11) target = $region8
  $region5: #{gpn_forward.1} parent=0 // loop_body
    %s15 = ssub.s32 %s10, 1
    %s16 = ssub.s32 %s10, 2
    %s17 = sadd.s32 %s10, 1
    %s18 = ssub.s32 %s10, %s17
    %p19 = scmp.eq.s32.totalorder %s18, 0
    %s21 = sadd.s32 %s20, 1
    %s22 = scalar_select %p19, %s20, %s21
    %p25 = pneg %p19
    %p26 = scmp.eq.s32.totalorder %s10, 1
    %p27 = por %p25, %p26
    %p28 = scmp.ne.s32.totalorder %s20, %s23
    %p29 = scmp.eq.s32.totalorder %s10, 0
    %p30 = por %p28, %p29
    %p31 = scmp.ne.s32.totalorder %s20, %s23
    %p32 = scmp.eq.s32.totalorder %s15, 1
    %p33 = por %p31, %p32
    %p34 = scmp.ne.s32.totalorder %s23, %s24
    %p35 = scmp.eq.s32.totalorder %s15, 0
    %p36 = por %p34, %p35
    %p37 = scmp.ne.s32.totalorder %s23, %s24
    %p38 = scmp.eq.s32.totalorder %s16, 1
    %p39 = por %p37, %p38
    %p41 = scmp.ne.s32.totalorder %s24, %s40
    %p42 = scmp.eq.s32.totalorder %s16, 0
    %p43 = por %p41, %p42
    %s44 = ssub.s32 %s10, %s17
    %p45 = scmp.eq.s32.totalorder %s44, 0
    %s47 = sadd.s32 %s46, 1
    %s48 = scalar_select %p45, %s46, %s47
    %p51 = pneg %p45
    %p52 = scmp.eq.s32.totalorder %s10, 1
    %p53 = por %p51, %p52
    %p54 = scmp.ne.s32.totalorder %s46, %s49
    %p55 = scmp.eq.s32.totalorder %s10, 0
    %p56 = por %p54, %p55
    %p57 = scmp.ne.s32.totalorder %s46, %s49
    %p58 = scmp.eq.s32.totalorder %s15, 1
    %p59 = por %p57, %p58
    %p60 = scmp.ne.s32.totalorder %s49, %s50
    %p61 = scmp.eq.s32.totalorder %s15, 0
    %p62 = por %p60, %p61
    %p63 = scmp.ne.s32.totalorder %s49, %s50
    %p64 = scmp.eq.s32.totalorder %s16, 1
    %p65 = por %p63, %p64
    %p67 = scmp.ne.s32.totalorder %s50, %s66
    %p68 = scmp.eq.s32.totalorder %s16, 0
    %p69 = por %p67, %p68
    %s70 = ssub.s32 %s10, %s17
    %p71 = scmp.eq.s32.totalorder %s70, 0
    %s73 = sadd.s32 %s72, 1
    %s74 = scalar_select %p71, %s72, %s73
    %p77 = pneg %p71
    %p78 = scmp.eq.s32.totalorder %s10, 1
    %p79 = por %p77, %p78
    %p80 = scmp.ne.s32.totalorder %s72, %s75
    %p81 = scmp.eq.s32.totalorder %s10, 0
    %p82 = por %p80, %p81
    %p83 = scmp.ne.s32.totalorder %s72, %s75
    %p84 = scmp.eq.s32.totalorder %s15, 1
    %p85 = por %p83, %p84
    %p86 = scmp.ne.s32.totalorder %s75, %s76
    %p87 = scmp.eq.s32.totalorder %s15, 0
    %p88 = por %p86, %p87
    %p89 = scmp.ne.s32.totalorder %s75, %s76
    %p90 = scmp.eq.s32.totalorder %s16, 1
    %p91 = por %p89, %p90
    %p93 = scmp.ne.s32.totalorder %s76, %s92
    %p94 = scmp.eq.s32.totalorder %s16, 0
    %p95 = por %p93, %p94
    %s96 = ssub.s32 %s10, %s17
    %p97 = scmp.eq.s32.totalorder %s96, 0
    %s99 = sadd.s32 %s98, 1
    %s100 = scalar_select %p97, %s98, %s99
    %p103 = pneg %p97
    %p104 = scmp.eq.s32.totalorder %s10, 1
    %p105 = por %p103, %p104
    %p106 = scmp.ne.s32.totalorder %s98, %s101
    %p107 = scmp.eq.s32.totalorder %s10, 0
    %p108 = por %p106, %p107
    %p109 = scmp.ne.s32.totalorder %s98, %s101
    %p110 = scmp.eq.s32.totalorder %s15, 1
    %p111 = por %p109, %p110
    %p112 = scmp.ne.s32.totalorder %s101, %s102
    %p113 = scmp.eq.s32.totalorder %s15, 0
    %p114 = por %p112, %p113
    %p115 = scmp.ne.s32.totalorder %s101, %s102
    %p116 = scmp.eq.s32.totalorder %s16, 1
    %p117 = por %p115, %p116
    %p119 = scmp.ne.s32.totalorder %s102, %s118
    %p120 = scmp.eq.s32.totalorder %s16, 0
    %p121 = por %p119, %p120
    %p122 = scmp.le.s32.totalorder 1, %s10
    %p123 = scmp.lt.s32.totalorder %s10, 3
    %p124 = pnand %p122, %p123
    %p125 = pneg %p124
    // Predicated region
    $region9: #{gpn_forward.1} parent=5 // pred_check
      _
    $region10: #{gpn_forward.1} parent=5 // pred_check_branch
      %127 = sbr.rel (%p124) target = $region12
    $region11: #{gpn_forward.1} parent=5 // pred_region
      %s128 = ssub.s32 %s10, 1
    $region12: #{gpn_forward.1} parent=5 // pred_fallthru
      _
    %p129 = scmp.lt.s32.totalorder %s10, 2
    // Predicated region
    $region13: #{gpn_forward.1} parent=5 // pred_check
      %p130 = pneg %p129
    $region14: #{gpn_forward.1} parent=5 // pred_check_branch
      %132 = sbr.rel (%p130) target = $region16
    $region15: #{gpn_forward.1} parent=5 // pred_region
      // Predicated region
      $region17: #{gpn_forward.1} parent=15 // pred_check
        %p133 = pneg %p30
      $region18: #{gpn_forward.1} parent=15 // pred_check_branch
        %135 = sbr.rel (%p133) target = $region20
      $region19: #{gpn_forward.1} parent=15 // pred_region
        %p136 = scmp.lt.s32.totalorder %s10, 1
        %s137 = scalar_select %p136, %s10, 1
        %s138 = smul.addr %s137, 8
        %s139 = scalar_lea.vmem %s0, %s138
      $region20: #{gpn_forward.1} parent=15 // pred_fallthru
        _
      // Predicated region
      $region21: #{gpn_forward.1} parent=15 // pred_check
        %p140 = pneg %p56
      $region22: #{gpn_forward.1} parent=15 // pred_check_branch
        %142 = sbr.rel (%p140) target = $region24
      $region23: #{gpn_forward.1} parent=15 // pred_region
        %p143 = scmp.lt.s32.totalorder %s10, 1
        %s144 = scalar_select %p143, %s10, 1
        %s145 = smul.addr %s144, 8
        %s146 = scalar_lea.vmem %s1, %s145
      $region24: #{gpn_forward.1} parent=15 // pred_fallthru
        _
    $region16: #{gpn_forward.1} parent=5 // pred_fallthru
      _
    %p147 = scmp.le.s32.totalorder 1, %s10
    %p148 = scmp.lt.s32.totalorder %s10, 3
    %p149 = pnand %p147, %p148
    %p150 = pneg %p149
    // Predicated region
    $region25: #{gpn_forward.1} parent=5 // pred_check
      _
    $region26: #{gpn_forward.1} parent=5 // pred_check_branch
      %152 = sbr.rel (%p149) target = $region28
    $region27: #{gpn_forward.1} parent=5 // pred_region
      %s153 = ssub.s32 %s10, 1
      %p154 = scmp.lt.s32.totalorder %s15, 1
      %s155 = scalar_select %p154, %s15, 1
      %s156 = smul.addr %s155, 8
      %s157 = scalar_lea.vmem %s0, %s156
      %p158 = pneg %p36
      %p159 = pneg %p33
      %p160 = scmp.lt.s32.totalorder %s15, 1
      %s161 = scalar_select %p160, %s15, 1
      %s162 = smul.addr %s161, 8
      %s163 = scalar_lea.vmem %s1, %s162
      %p164 = pneg %p62
      %p165 = pneg %p59
      %p166 = pneg %p88
      %p167 = pneg %p85
      %p168 = scmp.lt.s32.totalorder %s15, 1
      %s169 = scalar_select %p168, %s15, 1
      %s170 = smul.addr %s169, 8
      %s171 = scalar_lea.vmem %s2, %s170
      %p172 = pneg %p114
      %p173 = pneg %p111
      %p174 = scmp.lt.s32.totalorder %s15, 1
      %s175 = scalar_select %p174, %s15, 1
      %s176 = smul.addr %s175, 8
      %s177 = scalar_lea.vmem %s3, %s176
      %p178 = scmp.lt.s32.totalorder %s15, 1
      %s179 = scalar_select %p178, %s15, 1
      %s180 = smul.addr %s179, 8
      %s181 = scalar_lea.vmem %s0, %s180
      %p182 = scmp.lt.s32.totalorder %s15, 1
      %s183 = scalar_select %p182, %s15, 1
      %s184 = smul.addr %s183, 8
      %s185 = scalar_lea.vmem %s1, %s184
      %p186 = scmp.lt.s32.totalorder %s15, 1
      %s187 = scalar_select %p186, %s15, 1
      %s188 = smul.addr %s187, 8
      %s189 = scalar_lea.vmem %s2, %s188
      %p190 = scmp.lt.s32.totalorder %s15, 1
      %s191 = scalar_select %p190, %s15, 1
      %s192 = smul.addr %s191, 8
      %s193 = scalar_lea.vmem %s3, %s192
      %v194 = vld [vmem:[%s185] sm:$0xff]
      %v195 = vld [vmem:[%s181] sm:$0xff]
      %v196 = vadd.f32 %v194, %v195
      %v197 = vmul.f32 %v196, 0.5
      %vm198 = vcmp.ge.f32.partialorder %v197, 1.0
      %v199 = vsel %vm198, 1, 0
      %v200 = vcvt.s32.f32 %v199
      %201 = vst [vmem:[%s189] sm:$0xff] %v200
      %v202 = vsel %vm198, 0.0, %v197
      %203 = vst [vmem:[%s193] sm:$0xff] %v202
      %p204 = scmp.lt.s32.totalorder %s15, 1
      %s205 = scalar_select %p204, %s15, 1
      %s206 = smul.addr %s205, 8
      %s207 = scalar_lea.vmem %s2, %s206
      %p208 = scmp.lt.s32.totalorder %s15, 1
      %s209 = scalar_select %p208, %s15, 1
      %s210 = smul.addr %s209, 8
      %s211 = scalar_lea.vmem %s3, %s210
      // Predicated region
      $region29: #{gpn_forward.1} parent=27 // pred_check
        %p212 = pneg %p85
      $region30: #{gpn_forward.1} parent=27 // pred_check_branch
        %214 = sbr.rel (%p212) target = $region32
      $region31: #{gpn_forward.1} parent=27 // pred_region
        _
      $region32: #{gpn_forward.1} parent=27 // pred_fallthru
        _
      // Predicated region
      $region33: #{gpn_forward.1} parent=27 // pred_check
        %p215 = pneg %p111
      $region34: #{gpn_forward.1} parent=27 // pred_check_branch
        %217 = sbr.rel (%p215) target = $region36
      $region35: #{gpn_forward.1} parent=27 // pred_region
        _
      $region36: #{gpn_forward.1} parent=27 // pred_fallthru
        _
    $region28: #{gpn_forward.1} parent=5 // pred_fallthru
      _
    %p218 = scmp.le.s32.totalorder 2, %s10
    // Predicated region
    $region37: #{gpn_forward.1} parent=5 // pred_check
      %p219 = pneg %p218
    $region38: #{gpn_forward.1} parent=5 // pred_check_branch
      %221 = sbr.rel (%p219) target = $region40
    $region39: #{gpn_forward.1} parent=5 // pred_region
      %s222 = ssub.s32 %s10, 2
      // Predicated region
      $region41: #{gpn_forward.1} parent=39 // pred_check
        %p223 = pneg %p91
      $region42: #{gpn_forward.1} parent=39 // pred_check_branch
        %225 = sbr.rel (%p223) target = $region44
      $region43: #{gpn_forward.1} parent=39 // pred_region
        %p226 = scmp.lt.s32.totalorder %s16, 1
        %s227 = scalar_select %p226, %s16, 1
        %s228 = smul.addr %s227, 8
        %s229 = scalar_lea.vmem %s2, %s228
      $region44: #{gpn_forward.1} parent=39 // pred_fallthru
        _
      // Predicated region
      $region45: #{gpn_forward.1} parent=39 // pred_check
        %p230 = pneg %p117
      $region46: #{gpn_forward.1} parent=39 // pred_check_branch
        %232 = sbr.rel (%p230) target = $region48
      $region47: #{gpn_forward.1} parent=39 // pred_region
        %p233 = scmp.lt.s32.totalorder %s16, 1
        %s234 = scalar_select %p233, %s16, 1
        %s235 = smul.addr %s234, 8
        %s236 = scalar_lea.vmem %s3, %s235
      $region48: #{gpn_forward.1} parent=39 // pred_fallthru
        _
    $region40: #{gpn_forward.1} parent=5 // pred_fallthru
      _
  $region6: #{gpn_forward.1} parent=0 // loop_footer
    %s14 = sadd.s32 1, %s10
  $region7: #{gpn_forward.1} parent=0 // loop_footer_branch
    %9 = sbr.rel target = $region3
  $region8: #{gpn_forward.1} parent=0 // loop_exit
    _

</llo_original>
